<compile_context>
chip_gen: v6e
topology: v6e:2x2x1
jax: 0.10.0
libtpu: 0.0.40
codegen_flags: <defaults>
</compile_context>

<pallas_src>
import functools

import jax
import jax.numpy as jnp
from jax.experimental import pallas as pl
from jax.experimental.pallas import tpu as pltpu


def _round_up(a: int, b: int) -> int:
    return (a + b - 1) // b * b


def ffn_kernel(x_ref, w1_ref, b1_ref, w2_ref, b2_ref, o_ref, acc_ref):
    # x_ref:  (tm, hidden)      compute dtype (bf16 or f32)
    # w1_ref: (hidden, tf)      compute dtype
    # b1_ref: (1, tf)           f32
    # w2_ref: (tf, hidden)      compute dtype
    # b2_ref: (1, hidden)       f32
    # o_ref:  (tm, hidden)      output dtype
    # acc_ref:(tm, hidden)      f32 VMEM accumulator, resident across the k axis
    k = pl.program_id(1)

    @pl.when(k == 0)
    def _init():
        acc_ref[...] = jnp.zeros_like(acc_ref)

    # First GEMM tile + bias + ReLU, all with f32 accumulation / epilogue.
    h = jnp.dot(x_ref[...], w1_ref[...], preferred_element_type=jnp.float32)
    h = jnp.maximum(h + b1_ref[...], 0.0)
    # dropout == identity (inference).  TODO(synk): training-mode dropout.

    # Second GEMM tile accumulated into the persistent f32 scratch.
    acc_ref[...] += jnp.dot(h.astype(w2_ref.dtype), w2_ref[...],
                            preferred_element_type=jnp.float32)

    @pl.when(k == pl.num_programs(1) - 1)
    def _finalize():
        # Minimal, lane-dense epilogue: one bias add, one cast, one store.
        o_ref[...] = (acc_ref[...] + b2_ref[...]).astype(o_ref.dtype)


@functools.partial(jax.jit, static_argnames=("tm", "tf", "compute_dtype"))
def feed_forward_network(x, w1, b1, w2, b2, *, tm=256, tf=512,
                         compute_dtype=jnp.bfloat16):
    """x: (batch, seq, hidden). w1: (hidden, ff), b1: (ff,),
    w2: (ff, hidden), b2: (hidden,).  Returns (batch, seq, hidden) in x.dtype.

    Weights are stored transposed vs PyTorch ((in, out)) so y = x @ W + b.
    """
    batch, seq, hidden = x.shape
    ff = w1.shape[1]
    out_dtype = x.dtype
    N = batch * seq

    # Shrink tiles for tiny inputs, keeping (8,128)/bf16-packing granularity.
    tm = max(16, min(tm, _round_up(N, 16)))       # rows: multiple of 16
    tf = max(128, min(tf, _round_up(ff, 128)))    # ff:   multiple of 128

    n_pad = _round_up(N, tm)
    ff_pad = _round_up(ff, tf)

    x2 = x.reshape(N, hidden)
    if n_pad != N:
        x2 = jnp.pad(x2, ((0, n_pad - N), (0, 0)))
    if ff_pad != ff:
        # Zero-padded ff columns/rows contribute exactly 0 to the output.
        w1 = jnp.pad(w1, ((0, 0), (0, ff_pad - ff)))
        b1 = jnp.pad(b1, ((0, ff_pad - ff),))
        w2 = jnp.pad(w2, ((0, ff_pad - ff), (0, 0)))

    cdt = jnp.dtype(compute_dtype)
    x2 = x2.astype(cdt)
    w1 = w1.astype(cdt)
    w2 = w2.astype(cdt)
    b1_2 = b1.reshape(1, ff_pad).astype(jnp.float32)
    b2_2 = b2.reshape(1, hidden).astype(jnp.float32)

    grid = (n_pad // tm, ff_pad // tf)

    # Explicit VMEM budget: tiles + double-buffering + f32 accumulator,
    # capped safely under v7x's 64 MiB per-TensorCore VMEM.
    cdsize = cdt.itemsize
    odsize = jnp.dtype(out_dtype).itemsize
    tile_bytes = (2 * tm * hidden * cdsize          # x tile (double-buffered)
                  + 2 * tm * hidden * odsize        # out tile (double-buffered)
                  + 2 * hidden * tf * cdsize        # W1 tile (double-buffered)
                  + 2 * tf * hidden * cdsize        # W2 tile (double-buffered)
                  + 2 * (tf + hidden) * 4           # biases
                  + tm * hidden * 4)                # f32 accumulator scratch
    vmem_limit = int(min(tile_bytes + (16 << 20), 48 << 20))

    cost = pl.CostEstimate(
        flops=4 * n_pad * hidden * ff_pad,          # two GEMMs, 2 flops/MAC
        transcendentals=0,
        bytes_accessed=int(x2.size * cdsize + w1.size * cdsize
                           + w2.size * cdsize + b1_2.size * 4 + b2_2.size * 4
                           + n_pad * hidden * odsize),
    )

    out = pl.pallas_call(
        ffn_kernel,
        out_shape=jax.ShapeDtypeStruct((n_pad, hidden), out_dtype),
        grid_spec=pltpu.PrefetchScalarGridSpec(
            num_scalar_prefetch=0,
            grid=grid,
            in_specs=[
                pl.BlockSpec((tm, hidden), lambda i, k: (i, 0)),   # x rows
                pl.BlockSpec((hidden, tf), lambda i, k: (0, k)),   # W1 ff-tile
                pl.BlockSpec((1, tf),      lambda i, k: (0, k)),   # b1 ff-tile
                pl.BlockSpec((tf, hidden), lambda i, k: (k, 0)),   # W2 ff-tile
                pl.BlockSpec((1, hidden),  lambda i, k: (0, 0)),   # b2
            ],
            out_specs=pl.BlockSpec((tm, hidden), lambda i, k: (i, 0)),
            scratch_shapes=[pltpu.VMEM((tm, hidden), jnp.float32)],
        ),
        compiler_params=pltpu.CompilerParams(
            dimension_semantics=("parallel", "arbitrary"),
            vmem_limit_bytes=vmem_limit,
        ),
        cost_estimate=cost,
    )(x2, w1, b1_2, w2, b2_2)

    return out[:N].reshape(batch, seq, hidden)


def init_params(key, hidden_size, ff_size, dtype=jnp.float32):
    """Deterministic init matching nn.Linear shapes (stored transposed)."""
    k1, k2, k3, k4 = jax.random.split(key, 4)
    bound1 = 1.0 / (hidden_size ** 0.5)
    bound2 = 1.0 / (ff_size ** 0.5)
    # PyTorch Linear: weight (out, in); we keep (in, out) for x @ W.
    w1 = jax.random.uniform(k1, (hidden_size, ff_size), dtype, -bound1, bound1)
    b1 = jax.random.uniform(k2, (ff_size,), dtype, -bound1, bound1)
    w2 = jax.random.uniform(k3, (ff_size, hidden_size), dtype, -bound2, bound2)
    b2 = jax.random.uniform(k4, (hidden_size,), dtype, -bound2, bound2)
    return w1, b1, w2, b2


if __name__ == "__main__":
    key = jax.random.PRNGKey(0)
    kx, kp = jax.random.split(key)

    # Shapes consistent with the module: hidden_size=256, ff = 4*hidden.
    batch, seq, hidden, ff = 2, 8, 256, 1024
    x = jax.random.normal(kx, (batch, seq, hidden), jnp.float32)
    w1, b1, w2, b2 = init_params(kp, hidden, ff)

    ref = jnp.maximum(x @ w1 + b1, 0.0) @ w2 + b2

    # f32 path (tight check).
    out_f32 = feed_forward_network(x, w1, b1, w2, b2,
                                   compute_dtype=jnp.float32)
    out_f32 = jax.block_until_ready(out_f32)
    assert out_f32.shape == (batch, seq, hidden)
    assert out_f32.dtype == x.dtype
    assert jnp.allclose(out_f32, ref, atol=1e-3, rtol=1e-3)

    # bf16 operands / f32 accumulation path (default; loose check).
    out_bf16 = feed_forward_network(x, w1, b1, w2, b2,
                                    compute_dtype=jnp.bfloat16)
    out_bf16 = jax.block_until_ready(out_bf16)
    assert out_bf16.shape == (batch, seq, hidden)
    assert jnp.allclose(out_bf16, ref, atol=2e-2, rtol=2e-2)

    print("KERNEL_OK")
</pallas_src>

<mosaic_0001>
module attributes {stable_mosaic.version = 11 : i64} {
  func.func @ffn_kernel(%arg0: i32, %arg1: i32, %arg2: memref<16x256xf32, #tpu.memory_space<vmem>>, %arg3: memref<256x512xf32, #tpu.memory_space<vmem>>, %arg4: memref<1x512xf32, #tpu.memory_space<vmem>>, %arg5: memref<512x256xf32, #tpu.memory_space<vmem>>, %arg6: memref<1x256xf32, #tpu.memory_space<vmem>>, %arg7: memref<16x256xf32, #tpu.memory_space<vmem>>, %arg8: memref<16x256xf32, #tpu.memory_space<vmem>>) attributes {dimension_semantics = [#tpu.dimension_semantics<parallel>, #tpu.dimension_semantics<arbitrary>], iteration_bounds = array<i64: 1, 2>, scalar_prefetch = 0 : i64, scratch_operands = 1 : i64, tpu.core_type = #tpu.core_type<tc>, window_params = [{transform_indices = @transform_0, window_bounds = array<i64: 16, 256>}, {transform_indices = @transform_1, window_bounds = array<i64: 256, 512>}, {transform_indices = @transform_2, window_bounds = array<i64: 1, 512>}, {transform_indices = @transform_3, window_bounds = array<i64: 512, 256>}, {pipeline_mode = #tpu.pipeline_mode<synchronous>, transform_indices = @transform_4, window_bounds = array<i64: 1, 256>}, {transform_indices = @transform_5, window_bounds = array<i64: 16, 256>}]} {
    %c0_i32 = arith.constant 0 : i32
    %0 = arith.cmpi eq, %arg1, %c0_i32 : i32
    %1 = arith.extui %0 : i1 to i32
    %c0_i32_0 = arith.constant 0 : i32
    %2 = arith.cmpi ne, %1, %c0_i32_0 : i32
    scf.if %2 {
      %cst_15 = arith.constant 0.000000e+00 : f32
      %19 = vector.broadcast %cst_15 : f32 to vector<16x256xf32>
      %c0_16 = arith.constant 0 : index
      %c0_17 = arith.constant 0 : index
      %20 = vector.load %arg8[%c0_16, %c0_17] : memref<16x256xf32, #tpu.memory_space<vmem>>, vector<16x256xf32>
      tpu.vector_store %arg8[%c0_16, %c0_17], %19 {strides = array<i32>} : memref<16x256xf32, #tpu.memory_space<vmem>>, vector<16x256xf32>,
    } else {
    }
    %c0 = arith.constant 0 : index
    %c0_1 = arith.constant 0 : index
    %3 = vector.load %arg2[%c0, %c0_1] : memref<16x256xf32, #tpu.memory_space<vmem>>, vector<16x256xf32>
    %c0_2 = arith.constant 0 : index
    %c0_3 = arith.constant 0 : index
    %4 = vector.load %arg3[%c0_2, %c0_3] : memref<256x512xf32, #tpu.memory_space<vmem>>, vector<256x512xf32>
    %cst = arith.constant dense<0.000000e+00> : vector<16x512xf32>
    %5 = tpu.matmul %3, %4, %cst {dimension_numbers = #tpu.dot_dimension_numbers<[1], [0], [0], [1], [0, 0, 1, 1], [], []>} : vector<16x256xf32>, vector<256x512xf32>, vector<16x512xf32> -> vector<16x512xf32>
    %c0_4 = arith.constant 0 : index
    %c0_5 = arith.constant 0 : index
    %6 = vector.load %arg4[%c0_4, %c0_5] : memref<1x512xf32, #tpu.memory_space<vmem>>, vector<1x512xf32>
    %7 = vector.broadcast %6 : vector<1x512xf32> to vector<16x512xf32>
    %8 = arith.addf %5, %7 : vector<16x512xf32>
    %cst_6 = arith.constant 0.000000e+00 : f32
    %9 = vector.broadcast %cst_6 : f32 to vector<16x512xf32>
    %10 = arith.maximumf %8, %9 : vector<16x512xf32>
    %c0_7 = arith.constant 0 : index
    %c0_8 = arith.constant 0 : index
    %11 = vector.load %arg8[%c0_7, %c0_8] : memref<16x256xf32, #tpu.memory_space<vmem>>, vector<16x256xf32>
    %c0_9 = arith.constant 0 : index
    %c0_10 = arith.constant 0 : index
    %12 = vector.load %arg5[%c0_9, %c0_10] : memref<512x256xf32, #tpu.memory_space<vmem>>, vector<512x256xf32>
    %cst_11 = arith.constant dense<0.000000e+00> : vector<16x256xf32>
    %13 = tpu.matmul %10, %12, %cst_11 {dimension_numbers = #tpu.dot_dimension_numbers<[1], [0], [0], [1], [0, 0, 1, 1], [], []>} : vector<16x512xf32>, vector<512x256xf32>, vector<16x256xf32> -> vector<16x256xf32>
    %14 = arith.addf %11, %13 : vector<16x256xf32>
    %c0_12 = arith.constant 0 : index
    %c0_13 = arith.constant 0 : index
    %15 = vector.load %arg8[%c0_12, %c0_13] : memref<16x256xf32, #tpu.memory_space<vmem>>, vector<16x256xf32>
    tpu.vector_store %arg8[%c0_12, %c0_13], %14 {strides = array<i32>} : memref<16x256xf32, #tpu.memory_space<vmem>>, vector<16x256xf32>,
    %c1_i32 = arith.constant 1 : i32
    %16 = arith.cmpi eq, %arg1, %c1_i32 : i32
    %17 = arith.extui %16 : i1 to i32
    %c0_i32_14 = arith.constant 0 : i32
    %18 = arith.cmpi ne, %17, %c0_i32_14 : i32
    scf.if %18 {
      %c0_15 = arith.constant 0 : index
      %c0_16 = arith.constant 0 : index
      %19 = vector.load %arg8[%c0_15, %c0_16] : memref<16x256xf32, #tpu.memory_space<vmem>>, vector<16x256xf32>
      %c0_17 = arith.constant 0 : index
      %c0_18 = arith.constant 0 : index
      %20 = vector.load %arg6[%c0_17, %c0_18] : memref<1x256xf32, #tpu.memory_space<vmem>>, vector<1x256xf32>
      %21 = vector.broadcast %20 : vector<1x256xf32> to vector<16x256xf32>
      %22 = arith.addf %19, %21 : vector<16x256xf32>
      %c0_19 = arith.constant 0 : index
      %c0_20 = arith.constant 0 : index
      %23 = vector.load %arg7[%c0_19, %c0_20] : memref<16x256xf32, #tpu.memory_space<vmem>>, vector<16x256xf32>
      tpu.vector_store %arg7[%c0_19, %c0_20], %22 {strides = array<i32>} : memref<16x256xf32, #tpu.memory_space<vmem>>, vector<16x256xf32>,
    } else {
    }
    return
  }
  func.func @transform_0(%arg0: i32, %arg1: i32) -> (i32, i32) {
    %c0_i32 = arith.constant 0 : i32
    %c0_i32_0 = arith.constant 0 : i32
    return %arg0, %c0_i32 : i32, i32
  }
  func.func @transform_1(%arg0: i32, %arg1: i32) -> (i32, i32) {
    %c0_i32 = arith.constant 0 : i32
    %c0_i32_0 = arith.constant 0 : i32
    return %c0_i32, %arg1 : i32, i32
  }
  func.func @transform_2(%arg0: i32, %arg1: i32) -> (i32, i32) {
    %c0_i32 = arith.constant 0 : i32
    %c0_i32_0 = arith.constant 0 : i32
    return %c0_i32, %arg1 : i32, i32
  }
  func.func @transform_3(%arg0: i32, %arg1: i32) -> (i32, i32) {
    %c0_i32 = arith.constant 0 : i32
    %c0_i32_0 = arith.constant 0 : i32
    return %arg1, %c0_i32 : i32, i32
  }
  func.func @transform_4(%arg0: i32, %arg1: i32) -> (i32, i32) {
    %c0_i32 = arith.constant 0 : i32
    %c0_i32_0 = arith.constant 0 : i32
    %c0_i32_1 = arith.constant 0 : i32
    return %c0_i32, %c0_i32_0 : i32, i32
  }
  func.func @transform_5(%arg0: i32, %arg1: i32) -> (i32, i32) {
    %c0_i32 = arith.constant 0 : i32
    %c0_i32_0 = arith.constant 0 : i32
    return %arg0, %c0_i32 : i32, i32
  }
}

</mosaic_0001>

<llo_original>
// kernel: feed_forward_network.1
$region0: #{feed_forward_network.1}
  #allocation0 [shape = 'u32[]', space=smem, size = 0x4, offset = 0x4, fixed_abs, tag = 'smem constant byte address 0x4 - core index']
  #allocation1 [shape = 'u32[144,128]{1,0:T(1,128)}', space=vmem, size = 0x12000, scoped, tag = 'internal scratch']
  #allocation2 [shape = 'f32[16,256]{1,0:T(8,128)}', space=vmem, size = 0x4000, scoped, tag = 'scratch operand']
  %s0 = inlined_call_operand.hbm [shape: f32[16,256], index: 0, kind: input, shape index: {}]
  %s1 = inlined_call_operand.hbm [shape: f32[256,1024], index: 1, kind: input, shape index: {}]
  %s2 = inlined_call_operand.vmem [shape: f32[1,1024], index: 2, kind: input, shape index: {}]
  %s3 = inlined_call_operand.hbm [shape: f32[1024,256], index: 3, kind: input, shape index: {}]
  %s4 = inlined_call_operand.vmem [shape: f32[1,256], index: 4, kind: input, shape index: {}]
  %s5 = inlined_call_operand.hbm [shape: f32[16,256], index: 5, kind: output, shape index: {}]
  %s6 = sld [smem:[#allocation0]]
  $region73: #{feed_forward_network.1} parent=0
    _
  %s8 = ssub.s32 1, %s6
  %s9 = scalar_select 0, %s8, %s6
  $region1: #{feed_forward_network.1} parent=0
    #allocation3 [shape = 'u8[16384]{0}', space=vmem, size = 0x4000, scoped, tag = 'input window, operand 0, single buffered']
    #allocation4 [shape = 's32[2]{0}', space=sflag, size = 0x8, scoped, tag = 'scoped memory for feed_forward_network.1']
    #allocation5 [shape = 's32[2]{0}', space=sflag, size = 0x8, scoped, tag = 'scoped memory for feed_forward_network.1']
    #allocation6 [shape = 'u8[1048576]{0}', space=vmem, size = 0x100000, scoped, tag = 'input window, operand 1']
    #allocation7 [shape = 's32[2]{0}', space=sflag, size = 0x8, scoped, tag = 'scoped memory for feed_forward_network.1']
    #allocation8 [shape = 'u8[1048576]{0}', space=vmem, size = 0x100000, scoped, tag = 'input window, operand 3']
    #allocation9 [shape = 'u8[16384]{0}', space=vmem, size = 0x4000, scoped, tag = 'output window, operand 0, single buffered']
    %10 = vsyncpa [#allocation4], 0
    %11 = vsyncpa [#allocation7], 0
    %s12 = scalar_lea.sflag [#allocation7], 1
    %13 = vsyncpa %s12, 0
    %14 = vsyncpa [#allocation5], 0
    loop: start=0, step=1, limit=4
    $region2: #{feed_forward_network.1} parent=1 // loop_pre_header
      _
    $region3: #{feed_forward_network.1} parent=1 // loop_header
      %s16 = sphi 0, %s20
      %p17 = scmp.ge.s32.totalorder %s16, 4
      %s23 = sphi 0, %s35
      %s24 = sphi 0, %s31
      %s25 = sphi 0, %s23
      %s26 = sphi 0, %s24
      %s27 = sphi 0, %s25
      %s28 = sphi 0, %s26
      %s38 = sphi 0, %s40
      %s41 = sphi 0, %s38
      %s42 = sphi 0, %s41
      %s58 = sphi 0, %s42
      %s64 = sphi 0, %s66
      %s67 = sphi 0, %s64
      %s68 = sphi 0, %s67
      %s84 = sphi 0, %s68
      %s90 = sphi 0, %s92
      %s93 = sphi 0, %s90
      %s94 = sphi 0, %s93
      %s110 = sphi 0, %s94
      %s116 = sphi 0, %s118
      %s119 = sphi 0, %s116
      %s120 = sphi 0, %s119
      %s136 = sphi 0, %s120
      %s140 = sphi 0, %s140
      %s142 = sphi 0, %s140
      %s143 = sphi 0, %s142
      %s157 = sphi 0, %s143
      %s163 = sphi 0, %s165
      %s166 = sphi 0, %s163
      %s167 = sphi 0, %s166
      %s183 = sphi 0, %s167
    $region4: #{feed_forward_network.1} parent=1 // loop_header_branch
      %19 = sbr.rel (%p17) target = $region8
    $region5: #{feed_forward_network.1} parent=1 // loop_body
      %s21 = ssub.s32 %s16, 1
      %s22 = ssub.s32 %s16, 2
      %s29 = sadd.s32 1, %s24
      %p30 = scmp.ge.s32.totalorder %s29, 2
      %s31 = scalar_select %p30, 0, %s29
      %s32 = sadd.s32 1, %s23
      %s33 = scalar_select %p30, %s32, %s23
      %p34 = scmp.ge.s32.totalorder %s33, 1
      %s35 = scalar_select %p34, 0, %s33
      %s36 = ssub.s32 %s23, %s35
      %p37 = scmp.eq.s32.totalorder %s36, 0
      %s39 = sadd.s32 %s38, 1
      %s40 = scalar_select %p37, %s38, %s39
      %p43 = pneg %p37
      %p44 = scmp.eq.s32.totalorder %s16, 1
      %p45 = por %p43, %p44
      %p46 = scmp.ne.s32.totalorder %s38, %s41
      %p47 = scmp.eq.s32.totalorder %s16, 0
      %p48 = por %p46, %p47
      %p49 = scmp.ne.s32.totalorder %s38, %s41
      %p50 = scmp.eq.s32.totalorder %s21, 1
      %p51 = por %p49, %p50
      %p52 = scmp.ne.s32.totalorder %s41, %s42
      %p53 = scmp.eq.s32.totalorder %s21, 0
      %p54 = por %p52, %p53
      %p55 = scmp.ne.s32.totalorder %s41, %s42
      %p56 = scmp.eq.s32.totalorder %s22, 1
      %p57 = por %p55, %p56
      %p59 = scmp.ne.s32.totalorder %s42, %s58
      %p60 = scmp.eq.s32.totalorder %s22, 0
      %p61 = por %p59, %p60
      %s62 = ssub.s32 %s24, %s31
      %p63 = scmp.eq.s32.totalorder %s62, 0
      %s65 = sadd.s32 %s64, 1
      %s66 = scalar_select %p63, %s64, %s65
      %p69 = pneg %p63
      %p70 = scmp.eq.s32.totalorder %s16, 1
      %p71 = por %p69, %p70
      %p72 = scmp.ne.s32.totalorder %s64, %s67
      %p73 = scmp.eq.s32.totalorder %s16, 0
      %p74 = por %p72, %p73
      %p75 = scmp.ne.s32.totalorder %s64, %s67
      %p76 = scmp.eq.s32.totalorder %s21, 1
      %p77 = por %p75, %p76
      %p78 = scmp.ne.s32.totalorder %s67, %s68
      %p79 = scmp.eq.s32.totalorder %s21, 0
      %p80 = por %p78, %p79
      %p81 = scmp.ne.s32.totalorder %s67, %s68
      %p82 = scmp.eq.s32.totalorder %s22, 1
      %p83 = por %p81, %p82
      %p85 = scmp.ne.s32.totalorder %s68, %s84
      %p86 = scmp.eq.s32.totalorder %s22, 0
      %p87 = por %p85, %p86
      %s88 = ssub.s32 %s24, %s31
      %p89 = scmp.eq.s32.totalorder %s88, 0
      %s91 = sadd.s32 %s90, 1
      %s92 = scalar_select %p89, %s90, %s91
      %p95 = pneg %p89
      %p96 = scmp.eq.s32.totalorder %s16, 1
      %p97 = por %p95, %p96
      %p98 = scmp.ne.s32.totalorder %s90, %s93
      %p99 = scmp.eq.s32.totalorder %s16, 0
      %p100 = por %p98, %p99
      %p101 = scmp.ne.s32.totalorder %s90, %s93
      %p102 = scmp.eq.s32.totalorder %s21, 1
      %p103 = por %p101, %p102
      %p104 = scmp.ne.s32.totalorder %s93, %s94
      %p105 = scmp.eq.s32.totalorder %s21, 0
      %p106 = por %p104, %p105
      %p107 = scmp.ne.s32.totalorder %s93, %s94
      %p108 = scmp.eq.s32.totalorder %s22, 1
      %p109 = por %p107, %p108
      %p111 = scmp.ne.s32.totalorder %s94, %s110
      %p112 = scmp.eq.s32.totalorder %s22, 0
      %p113 = por %p111, %p112
      %s114 = ssub.s32 %s24, %s31
      %p115 = scmp.eq.s32.totalorder %s114, 0
      %s117 = sadd.s32 %s116, 1
      %s118 = scalar_select %p115, %s116, %s117
      %p121 = pneg %p115
      %p122 = scmp.eq.s32.totalorder %s16, 1
      %p123 = por %p121, %p122
      %p124 = scmp.ne.s32.totalorder %s116, %s119
      %p125 = scmp.eq.s32.totalorder %s16, 0
      %p126 = por %p124, %p125
      %p127 = scmp.ne.s32.totalorder %s116, %s119
      %p128 = scmp.eq.s32.totalorder %s21, 1
      %p129 = por %p127, %p128
      %p130 = scmp.ne.s32.totalorder %s119, %s120
      %p131 = scmp.eq.s32.totalorder %s21, 0
      %p132 = por %p130, %p131
      %p133 = scmp.ne.s32.totalorder %s119, %s120
      %p134 = scmp.eq.s32.totalorder %s22, 1
      %p135 = por %p133, %p134
      %p137 = scmp.ne.s32.totalorder %s120, %s136
      %p138 = scmp.eq.s32.totalorder %s22, 0
      %p139 = por %p137, %p138
      %s141 = sadd.s32 %s140, 1
      %p144 = scmp.eq.s32.totalorder %s16, 1
      %p145 = scmp.ne.s32.totalorder %s140, %s142
      %p146 = scmp.eq.s32.totalorder %s16, 0
      %p147 = por %p145, %p146
      %p148 = scmp.ne.s32.totalorder %s140, %s142
      %p149 = scmp.eq.s32.totalorder %s21, 1
      %p150 = por %p148, %p149
      %p151 = scmp.ne.s32.totalorder %s142, %s143
      %p152 = scmp.eq.s32.totalorder %s21, 0
      %p153 = por %p151, %p152
      %p154 = scmp.ne.s32.totalorder %s142, %s143
      %p155 = scmp.eq.s32.totalorder %s22, 1
      %p156 = por %p154, %p155
      %p158 = scmp.ne.s32.totalorder %s143, %s157
      %p159 = scmp.eq.s32.totalorder %s22, 0
      %p160 = por %p158, %p159
      %s161 = ssub.s32 %s23, %s35
      %p162 = scmp.eq.s32.totalorder %s161, 0
      %s164 = sadd.s32 %s163, 1
      %s165 = scalar_select %p162, %s163, %s164
      %p168 = pneg %p162
      %p169 = scmp.eq.s32.totalorder %s16, 1
      %p170 = por %p168, %p169
      %p171 = scmp.ne.s32.totalorder %s163, %s166
      %p172 = scmp.eq.s32.totalorder %s16, 0
      %p173 = por %p171, %p172
      %p174 = scmp.ne.s32.totalorder %s163, %s166
      %p175 = scmp.eq.s32.totalorder %s21, 1
      %p176 = por %p174, %p175
      %p177 = scmp.ne.s32.totalorder %s166, %s167
      %p178 = scmp.eq.s32.totalorder %s21, 0
      %p179 = por %p177, %p178
      %p180 = scmp.ne.s32.totalorder %s166, %s167
      %p181 = scmp.eq.s32.totalorder %s22, 1
      %p182 = por %p180, %p181
      %p184 = scmp.ne.s32.totalorder %s167, %s183
      %p185 = scmp.eq.s32.totalorder %s22, 0
      %p186 = por %p184, %p185
      %p187 = scmp.le.s32.totalorder 1, %s16
      %p188 = scmp.lt.s32.totalorder %s16, 3
      %p189 = pnand %p187, %p188
      %p190 = pneg %p189
      // Predicated region
      $region9: #{feed_forward_network.1} parent=5 // pred_check
        _
      $region10: #{feed_forward_network.1} parent=5 // pred_check_branch
        %192 = sbr.rel (%p189) target = $region12
      $region11: #{feed_forward_network.1} parent=5 // pred_region
        %s193 = ssub.s32 %s16, 1
        // Predicated region
        $region13: #{feed_forward_network.1} parent=11 // pred_check
          %p194 = pneg %p54
        $region14: #{feed_forward_network.1} parent=11 // pred_check_branch
          %196 = sbr.rel (%p194) target = $region16
        $region15: #{feed_forward_network.1} parent=11 // pred_region
          %s197 = smul.u32 2, %s25
          %s199 = ssub.s32 512, 512
          %200 = vsyncadd [#allocation4], %s199
          %s201 = smul.addr %s197, 2
          %s202 = smul.addr %s201, 128
          %s203 = scalar_lea.hbm %s0, %s202
          %s204 = sshll.u32 [#allocation3], 4
          %s205 = int_to_ptr.vmem [resolvable:$true] %s204
          %210 = dma.hbm_to_vmem [thread:$0]  %s203, 512, %s205, [#allocation4], 256, 256, 16
        $region16: #{feed_forward_network.1} parent=11 // pred_fallthru
          _
        // Predicated region
        $region17: #{feed_forward_network.1} parent=11 // pred_check
          %p211 = pneg %p153
        $region18: #{feed_forward_network.1} parent=11 // pred_check_branch
          %213 = sbr.rel (%p211) target = $region20
        $region19: #{feed_forward_network.1} parent=11 // pred_region
          _
        $region20: #{feed_forward_network.1} parent=11 // pred_fallthru
          _
      $region12: #{feed_forward_network.1} parent=5 // pred_fallthru
        _
      %p214 = scmp.lt.s32.totalorder %s16, 2
      // Predicated region
      $region21: #{feed_forward_network.1} parent=5 // pred_check
        %p215 = pneg %p214
      $region22: #{feed_forward_network.1} parent=5 // pred_check_branch
        %217 = sbr.rel (%p215) target = $region24
      $region23: #{feed_forward_network.1} parent=5 // pred_region
        // Predicated region
        $region25: #{feed_forward_network.1} parent=23 // pred_check
          %p218 = pneg %p74
        $region26: #{feed_forward_network.1} parent=23 // pred_check_branch
          %220 = sbr.rel (%p218) target = $region28
        $region27: #{feed_forward_network.1} parent=23 // pred_region
          %s221 = sand.u32 %s16, 1
          %s222 = scalar_lea.sflag [#allocation7], %s221
          %s223 = sand.u32 %s64, 1
          %s224 = smul.addr %s223, 1024
          %s225 = scalar_lea.vmem [#allocation6], %s224
          %s226 = smul.u32 4, %s24
          %s228 = ssub.s32 16384, 16384
          %229 = vsyncadd %s222, %s228
          %s230 = smul.addr %s226, 128
          %s231 = scalar_lea.hbm %s1, %s230
          %s232 = sshll.u32 %s225, 4
          %s233 = int_to_ptr.vmem [resolvable:$true] %s232
          %238 = dma.hbm_to_vmem [thread:$0]  %s231, 16384, %s233, %s222, 1024, 512, 32
        $region28: #{feed_forward_network.1} parent=23 // pred_fallthru
          _
        // Predicated region
        $region29: #{feed_forward_network.1} parent=23 // pred_check
          %p239 = pneg %p100
        $region30: #{feed_forward_network.1} parent=23 // pred_check_branch
          %241 = sbr.rel (%p239) target = $region32
        $region31: #{feed_forward_network.1} parent=23 // pred_region
          %s242 = smul.u32 4, %s24
          %p243 = scmp.lt.s32.totalorder %s242, 7
          %s244 = scalar_select %p243, %s242, 7
          %s245 = scalar_lea.vmem %s2, %s244
          %s246 = smul.u32 4, %s24
        $region32: #{feed_forward_network.1} parent=23 // pred_fallthru
          _
        // Predicated region
        $region33: #{feed_forward_network.1} parent=23 // pred_check
          %p247 = pneg %p126
        $region34: #{feed_forward_network.1} parent=23 // pred_check_branch
          %249 = sbr.rel (%p247) target = $region36
        $region35: #{feed_forward_network.1} parent=23 // pred_region
          %s250 = sand.u32 %s16, 1
          %s251 = scalar_lea.sflag [#allocation7], %s250
          %s252 = sand.u32 %s116, 1
          %s253 = smul.addr %s252, 1024
          %s254 = scalar_lea.vmem [#allocation8], %s253
          %s255 = smul.u32 64, %s24
          %s257 = ssub.s32 16384, 16384
          %258 = vsyncadd %s251, %s257
          %s259 = smul.addr %s255, 2
          %s260 = smul.addr %s259, 128
          %s261 = scalar_lea.hbm %s3, %s260
          %s262 = sshll.u32 %s254, 4
          %s263 = int_to_ptr.vmem [resolvable:$true] %s262
          %268 = dma.hbm_to_vmem [thread:$0]  %s261, 16384, %s263, %s251, 256, 256, 16
        $region36: #{feed_forward_network.1} parent=23 // pred_fallthru
          _
      $region24: #{feed_forward_network.1} parent=5 // pred_fallthru
        _
      %p269 = scmp.le.s32.totalorder 1, %s16
      %p270 = scmp.lt.s32.totalorder %s16, 3
      %p271 = pnand %p269, %p270
      %p272 = pneg %p271
      // Predicated region
      $region37: #{feed_forward_network.1} parent=5 // pred_check
        _
      $region38: #{feed_forward_network.1} parent=5 // pred_check_branch
        %274 = sbr.rel (%p271) target = $region40
      $region39: #{feed_forward_network.1} parent=5 // pred_region
        %s275 = ssub.s32 %s16, 1
        // Predicated region
        $region41: #{feed_forward_network.1} parent=39 // pred_check
          %p276 = pneg %p54
        $region42: #{feed_forward_network.1} parent=39 // pred_check_branch
          %278 = sbr.rel (%p276) target = $region44
        $region43: #{feed_forward_network.1} parent=39 // pred_region
          %279 = dma.done [#allocation4], 512
        $region44: #{feed_forward_network.1} parent=39 // pred_fallthru
          _
        %s280 = sand.u32 %s21, 1
        %s281 = scalar_lea.sflag [#allocation7], %s280
        %s282 = sand.u32 %s67, 1
        %s283 = smul.addr %s282, 1024
        %s284 = scalar_lea.vmem [#allocation6], %s283
        // Predicated region
        $region45: #{feed_forward_network.1} parent=39 // pred_check
          %p285 = pneg %p80
        $region46: #{feed_forward_network.1} parent=39 // pred_check_branch
          %287 = sbr.rel (%p285) target = $region48
        $region47: #{feed_forward_network.1} parent=39 // pred_region
          %288 = dma.done %s281, 16384
        $region48: #{feed_forward_network.1} parent=39 // pred_fallthru
          _
        %s289 = sand.u32 %s21, 1
        %s290 = scalar_lea.sflag [#allocation7], %s289
        %s291 = sand.u32 %s119, 1
        %s292 = smul.addr %s291, 1024
        %s293 = scalar_lea.vmem [#allocation8], %s292
        // Predicated region
        $region49: #{feed_forward_network.1} parent=39 // pred_check
          %p294 = pneg %p132
        $region50: #{feed_forward_network.1} parent=39 // pred_check_branch
          %296 = sbr.rel (%p294) target = $region52
        $region51: #{feed_forward_network.1} parent=39 // pred_region
          %297 = dma.done %s290, 16384
        $region52: #{feed_forward_network.1} parent=39 // pred_fallthru
          _
        %p298 = pneg %p54
        %p299 = pneg %p51
        %s300 = sand.u32 %s21, 1
        %s301 = scalar_lea.sflag [#allocation7], %s300
        %s302 = sand.u32 %s67, 1
        %s303 = smul.addr %s302, 1024
        %s304 = scalar_lea.vmem [#allocation6], %s303
        %p305 = pneg %p80
        %p306 = pneg %p77
        %s307 = smul.u32 4, %s26
        %p308 = scmp.lt.s32.totalorder %s307, 7
        %s309 = scalar_select %p308, %s307, 7
        %s310 = scalar_lea.vmem %s2, %s309
        %p311 = pneg %p106
        %p312 = pneg %p103
        %s313 = sand.u32 %s21, 1
        %s314 = scalar_lea.sflag [#allocation7], %s313
        %s315 = sand.u32 %s119, 1
        %s316 = smul.addr %s315, 1024
        %s317 = scalar_lea.vmem [#allocation8], %s316
        %p318 = pneg %p132
        %p319 = pneg %p129
        %p320 = pneg %p153
        %p321 = pneg %p150
        %p322 = pneg %p179
        %p323 = pneg %p176
        %s324 = smul.u32 2, %s25
        %s325 = smul.u32 4, %s26
        %s326 = smul.u32 4, %s26
        %p327 = scmp.lt.s32.totalorder %s326, 7
        %s328 = scalar_select %p327, %s326, 7
        %s329 = scalar_lea.vmem %s2, %s328
        %s330 = smul.u32 4, %s26
        %s331 = smul.u32 64, %s26
        %s332 = smul.u32 2, %s25
        %p333 = scmp.eq.s32.totalorder %s26, 0
        // Predicated region
        $region53: #{feed_forward_network.1} parent=39 // pred_check
          %p334 = pneg %p333
        $region54: #{feed_forward_network.1} parent=39 // pred_check_branch
          %336 = sbr.rel (%p334) target = $region56
        $region55: #{feed_forward_network.1} parent=39 // pred_region
          %337 = vst [vmem:[#allocation2] sm:$0xff] 0.0
          %338 = vst [vmem:[#allocation2 + $0x8] sm:$0xff] 0.0
          %339 = vst [vmem:[#allocation2 + $0x10] sm:$0xff] 0.0
          %340 = vst [vmem:[#allocation2 + $0x18] sm:$0xff] 0.0
        $region56: #{feed_forward_network.1} parent=39 // pred_fallthru
          _
        %v341 = vld [vmem:[#allocation3] sm:$0xff]
        %v342 = vld [vmem:[#allocation3 + $0x8] sm:$0xff]
        %v343 = vld [vmem:[#allocation3 + $0x10] sm:$0xff]
        %v344 = vld [vmem:[#allocation3 + $0x18] sm:$0xff]
        %v345 = vld [vmem:[%s284] sm:$0xff]
        %v346 = vld [vmem:[%s284 + $0x8] sm:$0xff]
        %v347 = vld [vmem:[%s284 + $0x10] sm:$0xff]
        %v348 = vld [vmem:[%s284 + $0x18] sm:$0xff]
        %v349 = vld [vmem:[%s284 + $0x20] sm:$0xff]
        %v350 = vld [vmem:[%s284 + $0x28] sm:$0xff]
        %v351 = vld [vmem:[%s284 + $0x30] sm:$0xff]
        %v352 = vld [vmem:[%s284 + $0x38] sm:$0xff]
        %v353 = vld [vmem:[%s284 + $0x40] sm:$0xff]
        %v354 = vld [vmem:[%s284 + $0x48] sm:$0xff]
        %v355 = vld [vmem:[%s284 + $0x50] sm:$0xff]
        %v356 = vld [vmem:[%s284 + $0x58] sm:$0xff]
        %v357 = vld [vmem:[%s284 + $0x60] sm:$0xff]
        %v358 = vld [vmem:[%s284 + $0x68] sm:$0xff]
        %v359 = vld [vmem:[%s284 + $0x70] sm:$0xff]
        %v360 = vld [vmem:[%s284 + $0x78] sm:$0xff]
        %v361 = vld [vmem:[%s284 + $0x80] sm:$0xff]
        %v362 = vld [vmem:[%s284 + $0x88] sm:$0xff]
        %v363 = vld [vmem:[%s284 + $0x90] sm:$0xff]
        %v364 = vld [vmem:[%s284 + $0x98] sm:$0xff]
        %v365 = vld [vmem:[%s284 + $0xa0] sm:$0xff]
        %v366 = vld [vmem:[%s284 + $0xa8] sm:$0xff]
        %v367 = vld [vmem:[%s284 + $0xb0] sm:$0xff]
        %v368 = vld [vmem:[%s284 + $0xb8] sm:$0xff]
        %v369 = vld [vmem:[%s284 + $0xc0] sm:$0xff]
        %v370 = vld [vmem:[%s284 + $0xc8] sm:$0xff]
        %v371 = vld [vmem:[%s284 + $0xd0] sm:$0xff]
        %v372 = vld [vmem:[%s284 + $0xd8] sm:$0xff]
        %v373 = vld [vmem:[%s284 + $0xe0] sm:$0xff]
        %v374 = vld [vmem:[%s284 + $0xe8] sm:$0xff]
        %v375 = vld [vmem:[%s284 + $0xf0] sm:$0xff]
        %v376 = vld [vmem:[%s284 + $0xf8] sm:$0xff]
        %v377 = vld [vmem:[%s284 + $0x100] sm:$0xff]
        %v378 = vld [vmem:[%s284 + $0x108] sm:$0xff]
        %v379 = vld [vmem:[%s284 + $0x110] sm:$0xff]
        %v380 = vld [vmem:[%s284 + $0x118] sm:$0xff]
        %v381 = vld [vmem:[%s284 + $0x120] sm:$0xff]
        %v382 = vld [vmem:[%s284 + $0x128] sm:$0xff]
        %v383 = vld [vmem:[%s284 + $0x130] sm:$0xff]
        %v384 = vld [vmem:[%s284 + $0x138] sm:$0xff]
        %v385 = vld [vmem:[%s284 + $0x140] sm:$0xff]
        %v386 = vld [vmem:[%s284 + $0x148] sm:$0xff]
        %v387 = vld [vmem:[%s284 + $0x150] sm:$0xff]
        %v388 = vld [vmem:[%s284 + $0x158] sm:$0xff]
        %v389 = vld [vmem:[%s284 + $0x160] sm:$0xff]
        %v390 = vld [vmem:[%s284 + $0x168] sm:$0xff]
        %v391 = vld [vmem:[%s284 + $0x170] sm:$0xff]
        %v392 = vld [vmem:[%s284 + $0x178] sm:$0xff]
        %v393 = vld [vmem:[%s284 + $0x180] sm:$0xff]
        %v394 = vld [vmem:[%s284 + $0x188] sm:$0xff]
        %v395 = vld [vmem:[%s284 + $0x190] sm:$0xff]
        %v396 = vld [vmem:[%s284 + $0x198] sm:$0xff]
        %v397 = vld [vmem:[%s284 + $0x1a0] sm:$0xff]
        %v398 = vld [vmem:[%s284 + $0x1a8] sm:$0xff]
        %v399 = vld [vmem:[%s284 + $0x1b0] sm:$0xff]
        %v400 = vld [vmem:[%s284 + $0x1b8] sm:$0xff]
        %v401 = vld [vmem:[%s284 + $0x1c0] sm:$0xff]
        %v402 = vld [vmem:[%s284 + $0x1c8] sm:$0xff]
        %v403 = vld [vmem:[%s284 + $0x1d0] sm:$0xff]
        %v404 = vld [vmem:[%s284 + $0x1d8] sm:$0xff]
        %v405 = vld [vmem:[%s284 + $0x1e0] sm:$0xff]
        %v406 = vld [vmem:[%s284 + $0x1e8] sm:$0xff]
        %v407 = vld [vmem:[%s284 + $0x1f0] sm:$0xff]
        %v408 = vld [vmem:[%s284 + $0x1f8] sm:$0xff]
        %v409 = vld [vmem:[%s284 + $0x200] sm:$0xff]
        %v410 = vld [vmem:[%s284 + $0x208] sm:$0xff]
        %v411 = vld [vmem:[%s284 + $0x210] sm:$0xff]
        %v412 = vld [vmem:[%s284 + $0x218] sm:$0xff]
        %v413 = vld [vmem:[%s284 + $0x220] sm:$0xff]
        %v414 = vld [vmem:[%s284 + $0x228] sm:$0xff]
        %v415 = vld [vmem:[%s284 + $0x230] sm:$0xff]
        %v416 = vld [vmem:[%s284 + $0x238] sm:$0xff]
        %v417 = vld [vmem:[%s284 + $0x240] sm:$0xff]
        %v418 = vld [vmem:[%s284 + $0x248] sm:$0xff]
        %v419 = vld [vmem:[%s284 + $0x250] sm:$0xff]
        %v420 = vld [vmem:[%s284 + $0x258] sm:$0xff]
        %v421 = vld [vmem:[%s284 + $0x260] sm:$0xff]
        %v422 = vld [vmem:[%s284 + $0x268] sm:$0xff]
        %v423 = vld [vmem:[%s284 + $0x270] sm:$0xff]
        %v424 = vld [vmem:[%s284 + $0x278] sm:$0xff]
        %v425 = vld [vmem:[%s284 + $0x280] sm:$0xff]
        %v426 = vld [vmem:[%s284 + $0x288] sm:$0xff]
        %v427 = vld [vmem:[%s284 + $0x290] sm:$0xff]
        %v428 = vld [vmem:[%s284 + $0x298] sm:$0xff]
        %v429 = vld [vmem:[%s284 + $0x2a0] sm:$0xff]
        %v430 = vld [vmem:[%s284 + $0x2a8] sm:$0xff]
        %v431 = vld [vmem:[%s284 + $0x2b0] sm:$0xff]
        %v432 = vld [vmem:[%s284 + $0x2b8] sm:$0xff]
        %v433 = vld [vmem:[%s284 + $0x2c0] sm:$0xff]
        %v434 = vld [vmem:[%s284 + $0x2c8] sm:$0xff]
        %v435 = vld [vmem:[%s284 + $0x2d0] sm:$0xff]
        %v436 = vld [vmem:[%s284 + $0x2d8] sm:$0xff]
        %v437 = vld [vmem:[%s284 + $0x2e0] sm:$0xff]
        %v438 = vld [vmem:[%s284 + $0x2e8] sm:$0xff]
        %v439 = vld [vmem:[%s284 + $0x2f0] sm:$0xff]
        %v440 = vld [vmem:[%s284 + $0x2f8] sm:$0xff]
        %v441 = vld [vmem:[%s284 + $0x300] sm:$0xff]
        %v442 = vld [vmem:[%s284 + $0x308] sm:$0xff]
        %v443 = vld [vmem:[%s284 + $0x310] sm:$0xff]
        %v444 = vld [vmem:[%s284 + $0x318] sm:$0xff]
        %v445 = vld [vmem:[%s284 + $0x320] sm:$0xff]
        %v446 = vld [vmem:[%s284 + $0x328] sm:$0xff]
        %v447 = vld [vmem:[%s284 + $0x330] sm:$0xff]
        %v448 = vld [vmem:[%s284 + $0x338] sm:$0xff]
        %v449 = vld [vmem:[%s284 + $0x340] sm:$0xff]
        %v450 = vld [vmem:[%s284 + $0x348] sm:$0xff]
        %v451 = vld [vmem:[%s284 + $0x350] sm:$0xff]
        %v452 = vld [vmem:[%s284 + $0x358] sm:$0xff]
        %v453 = vld [vmem:[%s284 + $0x360] sm:$0xff]
        %v454 = vld [vmem:[%s284 + $0x368] sm:$0xff]
        %v455 = vld [vmem:[%s284 + $0x370] sm:$0xff]
        %v456 = vld [vmem:[%s284 + $0x378] sm:$0xff]
        %v457 = vld [vmem:[%s284 + $0x380] sm:$0xff]
        %v458 = vld [vmem:[%s284 + $0x388] sm:$0xff]
        %v459 = vld [vmem:[%s284 + $0x390] sm:$0xff]
        %v460 = vld [vmem:[%s284 + $0x398] sm:$0xff]
        %v461 = vld [vmem:[%s284 + $0x3a0] sm:$0xff]
        %v462 = vld [vmem:[%s284 + $0x3a8] sm:$0xff]
        %v463 = vld [vmem:[%s284 + $0x3b0] sm:$0xff]
        %v464 = vld [vmem:[%s284 + $0x3b8] sm:$0xff]
        %v465 = vld [vmem:[%s284 + $0x3c0] sm:$0xff]
        %v466 = vld [vmem:[%s284 + $0x3c8] sm:$0xff]
        %v467 = vld [vmem:[%s284 + $0x3d0] sm:$0xff]
        %v468 = vld [vmem:[%s284 + $0x3d8] sm:$0xff]
        %v469 = vld [vmem:[%s284 + $0x3e0] sm:$0xff]
        %v470 = vld [vmem:[%s284 + $0x3e8] sm:$0xff]
        %v471 = vld [vmem:[%s284 + $0x3f0] sm:$0xff]
        %v472 = vld [vmem:[%s284 + $0x3f8] sm:$0xff]
        %v473 = vld [vmem:[%s329] sm:$0xf]
        %v475 = vlaneseq
        %v476 = vshrl.u32 %v475, 7
        %v477 = vsub.s32 0, %v476
        %v478 = vrot.slane %v473, %v477
        %v479 = vlaneseq
        %v480 = vshrl.u32 %v479, 7
        %v481 = vsub.s32 1, %v480
        %v482 = vrot.slane %v473, %v481
        %v483 = vlaneseq
        %v484 = vshrl.u32 %v483, 7
        %v485 = vsub.s32 2, %v484
        %v486 = vrot.slane %v473, %v485
        %v487 = vlaneseq
        %v488 = vshrl.u32 %v487, 7
        %v489 = vsub.s32 3, %v488
        %v490 = vrot.slane %v473, %v489
        %495 = vmatprep.subr.mxu0 %v406
        %496 = vmatpush1.msra.mxu0 %v405
        %497 = vmatprep.subr.mxu0 %v402
        %498 = vmatpush1.msra.mxu0 %v401
        %499 = vmatprep.subr.mxu0 %v398
        %500 = vmatpush1.msra.mxu0 %v397
        %501 = vmatprep.subr.mxu0 %v394
        %502 = vmatpush1.msra.mxu0 %v393
        %503 = vmatprep.subr.mxu0 %v390
        %504 = vmatpush1.msra.mxu0 %v389
        %505 = vmatprep.subr.mxu0 %v386
        %506 = vmatpush1.msra.mxu0 %v385
        %507 = vmatprep.subr.mxu0 %v382
        %508 = vmatpush1.msra.mxu0 %v381
        %509 = vmatprep.subr.mxu0 %v378
        %510 = vmatpush1.msra.mxu0 %v377
        %511 = vmatprep.subr.mxu0 %v374
        %512 = vmatpush1.msra.mxu0 %v373
        %513 = vmatprep.subr.mxu0 %v370
        %514 = vmatpush1.msra.mxu0 %v369
        %515 = vmatprep.subr.mxu0 %v366
        %516 = vmatpush1.msra.mxu0 %v365
        %517 = vmatprep.subr.mxu0 %v362
        %518 = vmatpush1.msra.mxu0 %v361
        %519 = vmatprep.subr.mxu0 %v358
        %520 = vmatpush1.msra.mxu0 %v357
        %521 = vmatprep.subr.mxu0 %v354
        %522 = vmatpush1.msra.mxu0 %v353
        %523 = vmatprep.subr.mxu0 %v350
        %524 = vmatpush1.msra.mxu0 %v349
        %525 = vmatprep.subr.mxu0 %v346
        %526 = vmatpush1.msra.mxu0 %v345
        %527 = vmatprep.subr.mxu0 %v470
        %528 = vmatpush2.msra.mxu0 %v469
        %529 = vmatprep.subr.mxu0 %v466
        %530 = vmatpush2.msra.mxu0 %v465
        %531 = vmatprep.subr.mxu0 %v462
        %532 = vmatpush2.msra.mxu0 %v461
        %533 = vmatprep.subr.mxu0 %v458
        %534 = vmatpush2.msra.mxu0 %v457
        %535 = vmatprep.subr.mxu0 %v454
        %536 = vmatpush2.msra.mxu0 %v453
        %537 = vmatprep.subr.mxu0 %v450
        %538 = vmatpush2.msra.mxu0 %v449
        %539 = vmatprep.subr.mxu0 %v446
        %540 = vmatpush2.msra.mxu0 %v445
        %541 = vmatprep.subr.mxu0 %v442
        %542 = vmatpush2.msra.mxu0 %v441
        %543 = vmatprep.subr.mxu0 %v438
        %544 = vmatpush2.msra.mxu0 %v437
        %545 = vmatprep.subr.mxu0 %v434
        %546 = vmatpush2.msra.mxu0 %v433
        %547 = vmatprep.subr.mxu0 %v430
        %548 = vmatpush2.msra.mxu0 %v429
        %549 = vmatprep.subr.mxu0 %v426
        %550 = vmatpush2.msra.mxu0 %v425
        %551 = vmatprep.subr.mxu0 %v422
        %552 = vmatpush2.msra.mxu0 %v421
        %553 = vmatprep.subr.mxu0 %v418
        %554 = vmatpush2.msra.mxu0 %v417
        %555 = vmatprep.subr.mxu0 %v414
        %556 = vmatpush2.msra.mxu0 %v413
        %557 = vmatprep.subr.mxu0 %v410
        %558 = vmatpush2.msra.mxu0 %v409
        %559 = vmatprep.mubr.f32.mxu0 %v342
        %560 = vmatmul.mubr.f32.gmra.mxu0 %v341
        %v561 = vpop.f32.mrf.mxu0
        %v562 = vadd.f32 %v478, %v561
        %v563 = vpop.f32.mrf.mxu0
        %v564 = vadd.f32 %v482, %v563
        %565 = vmatprep.mubr.f32.mxu0 %v344
        %566 = vmatmul.mubr.f32.gmra.mxu0 %v343
        %v567 = vpop.f32.mrf.mxu0
        %v568 = vadd.f32 %v478, %v567
        %v569 = vpop.f32.mrf.mxu0
        %v570 = vadd.f32 %v482, %v569
        %571 = vdwg.mxu0
        %572 = vmatprep.subr.mxu0 %v408
        %573 = vmatpush1.msra.mxu0 %v407
        %574 = vmatprep.subr.mxu0 %v404
        %575 = vmatpush1.msra.mxu0 %v403
        %576 = vmatprep.subr.mxu0 %v400
        %577 = vmatpush1.msra.mxu0 %v399
        %578 = vmatprep.subr.mxu0 %v396
        %579 = vmatpush1.msra.mxu0 %v395
        %580 = vmatprep.subr.mxu0 %v392
        %581 = vmatpush1.msra.mxu0 %v391
        %582 = vmatprep.subr.mxu0 %v388
        %583 = vmatpush1.msra.mxu0 %v387
        %584 = vmatprep.subr.mxu0 %v384
        %585 = vmatpush1.msra.mxu0 %v383
        %586 = vmatprep.subr.mxu0 %v380
        %587 = vmatpush1.msra.mxu0 %v379
        %588 = vmatprep.subr.mxu0 %v376
        %589 = vmatpush1.msra.mxu0 %v375
        %590 = vmatprep.subr.mxu0 %v372
        %591 = vmatpush1.msra.mxu0 %v371
        %592 = vmatprep.subr.mxu0 %v368
        %593 = vmatpush1.msra.mxu0 %v367
        %594 = vmatprep.subr.mxu0 %v364
        %595 = vmatpush1.msra.mxu0 %v363
        %596 = vmatprep.subr.mxu0 %v360
        %597 = vmatpush1.msra.mxu0 %v359
        %598 = vmatprep.subr.mxu0 %v356
        %599 = vmatpush1.msra.mxu0 %v355
        %600 = vmatprep.subr.mxu0 %v352
        %601 = vmatpush1.msra.mxu0 %v351
        %602 = vmatprep.subr.mxu0 %v348
        %603 = vmatpush1.msra.mxu0 %v347
        %604 = vmatprep.subr.mxu0 %v472
        %605 = vmatpush2.msra.mxu0 %v471
        %606 = vmatprep.subr.mxu0 %v468
        %607 = vmatpush2.msra.mxu0 %v467
        %608 = vmatprep.subr.mxu0 %v464
        %609 = vmatpush2.msra.mxu0 %v463
        %610 = vmatprep.subr.mxu0 %v460
        %611 = vmatpush2.msra.mxu0 %v459
        %612 = vmatprep.subr.mxu0 %v456
        %613 = vmatpush2.msra.mxu0 %v455
        %614 = vmatprep.subr.mxu0 %v452
        %615 = vmatpush2.msra.mxu0 %v451
        %616 = vmatprep.subr.mxu0 %v448
        %617 = vmatpush2.msra.mxu0 %v447
        %618 = vmatprep.subr.mxu0 %v444
        %619 = vmatpush2.msra.mxu0 %v443
        %620 = vmatprep.subr.mxu0 %v440
        %621 = vmatpush2.msra.mxu0 %v439
        %622 = vmatprep.subr.mxu0 %v436
        %623 = vmatpush2.msra.mxu0 %v435
        %624 = vmatprep.subr.mxu0 %v432
        %625 = vmatpush2.msra.mxu0 %v431
        %626 = vmatprep.subr.mxu0 %v428
        %627 = vmatpush2.msra.mxu0 %v427
        %628 = vmatprep.subr.mxu0 %v424
        %629 = vmatpush2.msra.mxu0 %v423
        %630 = vmatprep.subr.mxu0 %v420
        %631 = vmatpush2.msra.mxu0 %v419
        %632 = vmatprep.subr.mxu0 %v416
        %633 = vmatpush2.msra.mxu0 %v415
        %634 = vmatprep.subr.mxu0 %v412
        %635 = vmatpush2.msra.mxu0 %v411
        %636 = vmatprep.mubr.f32.mxu0 %v342
        %637 = vmatmul.mubr.f32.gmra.mxu0 %v341
        %v638 = vpop.f32.mrf.mxu0
        %v639 = vadd.f32 %v486, %v638
        %v640 = vpop.f32.mrf.mxu0
        %v641 = vadd.f32 %v490, %v640
        %642 = vmatprep.mubr.f32.mxu0 %v344
        %643 = vmatmul.mubr.f32.gmra.mxu0 %v343
        %v644 = vpop.f32.mrf.mxu0
        %v645 = vadd.f32 %v486, %v644
        %v646 = vpop.f32.mrf.mxu0
        %v647 = vadd.f32 %v490, %v646
        %648 = vdwg.mxu0
        %v649 = vmax.f32 %v562, 0.0
        %v650 = vmax.f32 %v564, 0.0
        %v651 = vmax.f32 %v639, 0.0
        %v652 = vmax.f32 %v641, 0.0
        %v653 = vmax.f32 %v568, 0.0
        %v654 = vmax.f32 %v570, 0.0
        %v655 = vmax.f32 %v645, 0.0
        %v656 = vmax.f32 %v647, 0.0
        %v657 = vld [vmem:[#allocation2] sm:$0xff]
        %v658 = vld [vmem:[#allocation2 + $0x8] sm:$0xff]
        %v659 = vld [vmem:[#allocation2 + $0x10] sm:$0xff]
        %v660 = vld [vmem:[#allocation2 + $0x18] sm:$0xff]
        %v661 = vld [vmem:[%s293] sm:$0xff]
        %v662 = vld [vmem:[%s293 + $0x8] sm:$0xff]
        %v663 = vld [vmem:[%s293 + $0x10] sm:$0xff]
        %v664 = vld [vmem:[%s293 + $0x18] sm:$0xff]
        %v665 = vld [vmem:[%s293 + $0x20] sm:$0xff]
        %v666 = vld [vmem:[%s293 + $0x28] sm:$0xff]
        %v667 = vld [vmem:[%s293 + $0x30] sm:$0xff]
        %v668 = vld [vmem:[%s293 + $0x38] sm:$0xff]
        %v669 = vld [vmem:[%s293 + $0x40] sm:$0xff]
        %v670 = vld [vmem:[%s293 + $0x48] sm:$0xff]
        %v671 = vld [vmem:[%s293 + $0x50] sm:$0xff]
        %v672 = vld [vmem:[%s293 + $0x58] sm:$0xff]
        %v673 = vld [vmem:[%s293 + $0x60] sm:$0xff]
        %v674 = vld [vmem:[%s293 + $0x68] sm:$0xff]
        %v675 = vld [vmem:[%s293 + $0x70] sm:$0xff]
        %v676 = vld [vmem:[%s293 + $0x78] sm:$0xff]
        %v677 = vld [vmem:[%s293 + $0x80] sm:$0xff]
        %v678 = vld [vmem:[%s293 + $0x88] sm:$0xff]
        %v679 = vld [vmem:[%s293 + $0x90] sm:$0xff]
        %v680 = vld [vmem:[%s293 + $0x98] sm:$0xff]
        %v681 = vld [vmem:[%s293 + $0xa0] sm:$0xff]
        %v682 = vld [vmem:[%s293 + $0xa8] sm:$0xff]
        %v683 = vld [vmem:[%s293 + $0xb0] sm:$0xff]
        %v684 = vld [vmem:[%s293 + $0xb8] sm:$0xff]
        %v685 = vld [vmem:[%s293 + $0xc0] sm:$0xff]
        %v686 = vld [vmem:[%s293 + $0xc8] sm:$0xff]
        %v687 = vld [vmem:[%s293 + $0xd0] sm:$0xff]
        %v688 = vld [vmem:[%s293 + $0xd8] sm:$0xff]
        %v689 = vld [vmem:[%s293 + $0xe0] sm:$0xff]
        %v690 = vld [vmem:[%s293 + $0xe8] sm:$0xff]
        %v691 = vld [vmem:[%s293 + $0xf0] sm:$0xff]
        %v692 = vld [vmem:[%s293 + $0xf8] sm:$0xff]
        %v693 = vld [vmem:[%s293 + $0x100] sm:$0xff]
        %v694 = vld [vmem:[%s293 + $0x108] sm:$0xff]
        %v695 = vld [vmem:[%s293 + $0x110] sm:$0xff]
        %v696 = vld [vmem:[%s293 + $0x118] sm:$0xff]
        %v697 = vld [vmem:[%s293 + $0x120] sm:$0xff]
        %v698 = vld [vmem:[%s293 + $0x128] sm:$0xff]
        %v699 = vld [vmem:[%s293 + $0x130] sm:$0xff]
        %v700 = vld [vmem:[%s293 + $0x138] sm:$0xff]
        %v701 = vld [vmem:[%s293 + $0x140] sm:$0xff]
        %v702 = vld [vmem:[%s293 + $0x148] sm:$0xff]
        %v703 = vld [vmem:[%s293 + $0x150] sm:$0xff]
        %v704 = vld [vmem:[%s293 + $0x158] sm:$0xff]
        %v705 = vld [vmem:[%s293 + $0x160] sm:$0xff]
        %v706 = vld [vmem:[%s293 + $0x168] sm:$0xff]
        %v707 = vld [vmem:[%s293 + $0x170] sm:$0xff]
        %v708 = vld [vmem:[%s293 + $0x178] sm:$0xff]
        %v709 = vld [vmem:[%s293 + $0x180] sm:$0xff]
        %v710 = vld [vmem:[%s293 + $0x188] sm:$0xff]
        %v711 = vld [vmem:[%s293 + $0x190] sm:$0xff]
        %v712 = vld [vmem:[%s293 + $0x198] sm:$0xff]
        %v713 = vld [vmem:[%s293 + $0x1a0] sm:$0xff]
        %v714 = vld [vmem:[%s293 + $0x1a8] sm:$0xff]
        %v715 = vld [vmem:[%s293 + $0x1b0] sm:$0xff]
        %v716 = vld [vmem:[%s293 + $0x1b8] sm:$0xff]
        %v717 = vld [vmem:[%s293 + $0x1c0] sm:$0xff]
        %v718 = vld [vmem:[%s293 + $0x1c8] sm:$0xff]
        %v719 = vld [vmem:[%s293 + $0x1d0] sm:$0xff]
        %v720 = vld [vmem:[%s293 + $0x1d8] sm:$0xff]
        %v721 = vld [vmem:[%s293 + $0x1e0] sm:$0xff]
        %v722 = vld [vmem:[%s293 + $0x1e8] sm:$0xff]
        %v723 = vld [vmem:[%s293 + $0x1f0] sm:$0xff]
        %v724 = vld [vmem:[%s293 + $0x1f8] sm:$0xff]
        %v725 = vld [vmem:[%s293 + $0x200] sm:$0xff]
        %v726 = vld [vmem:[%s293 + $0x208] sm:$0xff]
        %v727 = vld [vmem:[%s293 + $0x210] sm:$0xff]
        %v728 = vld [vmem:[%s293 + $0x218] sm:$0xff]
        %v729 = vld [vmem:[%s293 + $0x220] sm:$0xff]
        %v730 = vld [vmem:[%s293 + $0x228] sm:$0xff]
        %v731 = vld [vmem:[%s293 + $0x230] sm:$0xff]
        %v732 = vld [vmem:[%s293 + $0x238] sm:$0xff]
        %v733 = vld [vmem:[%s293 + $0x240] sm:$0xff]
        %v734 = vld [vmem:[%s293 + $0x248] sm:$0xff]
        %v735 = vld [vmem:[%s293 + $0x250] sm:$0xff]
        %v736 = vld [vmem:[%s293 + $0x258] sm:$0xff]
        %v737 = vld [vmem:[%s293 + $0x260] sm:$0xff]
        %v738 = vld [vmem:[%s293 + $0x268] sm:$0xff]
        %v739 = vld [vmem:[%s293 + $0x270] sm:$0xff]
        %v740 = vld [vmem:[%s293 + $0x278] sm:$0xff]
        %v741 = vld [vmem:[%s293 + $0x280] sm:$0xff]
        %v742 = vld [vmem:[%s293 + $0x288] sm:$0xff]
        %v743 = vld [vmem:[%s293 + $0x290] sm:$0xff]
        %v744 = vld [vmem:[%s293 + $0x298] sm:$0xff]
        %v745 = vld [vmem:[%s293 + $0x2a0] sm:$0xff]
        %v746 = vld [vmem:[%s293 + $0x2a8] sm:$0xff]
        %v747 = vld [vmem:[%s293 + $0x2b0] sm:$0xff]
        %v748 = vld [vmem:[%s293 + $0x2b8] sm:$0xff]
        %v749 = vld [vmem:[%s293 + $0x2c0] sm:$0xff]
        %v750 = vld [vmem:[%s293 + $0x2c8] sm:$0xff]
        %v751 = vld [vmem:[%s293 + $0x2d0] sm:$0xff]
        %v752 = vld [vmem:[%s293 + $0x2d8] sm:$0xff]
        %v753 = vld [vmem:[%s293 + $0x2e0] sm:$0xff]
        %v754 = vld [vmem:[%s293 + $0x2e8] sm:$0xff]
        %v755 = vld [vmem:[%s293 + $0x2f0] sm:$0xff]
        %v756 = vld [vmem:[%s293 + $0x2f8] sm:$0xff]
        %v757 = vld [vmem:[%s293 + $0x300] sm:$0xff]
        %v758 = vld [vmem:[%s293 + $0x308] sm:$0xff]
        %v759 = vld [vmem:[%s293 + $0x310] sm:$0xff]
        %v760 = vld [vmem:[%s293 + $0x318] sm:$0xff]
        %v761 = vld [vmem:[%s293 + $0x320] sm:$0xff]
        %v762 = vld [vmem:[%s293 + $0x328] sm:$0xff]
        %v763 = vld [vmem:[%s293 + $0x330] sm:$0xff]
        %v764 = vld [vmem:[%s293 + $0x338] sm:$0xff]
        %v765 = vld [vmem:[%s293 + $0x340] sm:$0xff]
        %v766 = vld [vmem:[%s293 + $0x348] sm:$0xff]
        %v767 = vld [vmem:[%s293 + $0x350] sm:$0xff]
        %v768 = vld [vmem:[%s293 + $0x358] sm:$0xff]
        %v769 = vld [vmem:[%s293 + $0x360] sm:$0xff]
        %v770 = vld [vmem:[%s293 + $0x368] sm:$0xff]
        %v771 = vld [vmem:[%s293 + $0x370] sm:$0xff]
        %v772 = vld [vmem:[%s293 + $0x378] sm:$0xff]
        %v773 = vld [vmem:[%s293 + $0x380] sm:$0xff]
        %v774 = vld [vmem:[%s293 + $0x388] sm:$0xff]
        %v775 = vld [vmem:[%s293 + $0x390] sm:$0xff]
        %v776 = vld [vmem:[%s293 + $0x398] sm:$0xff]
        %v777 = vld [vmem:[%s293 + $0x3a0] sm:$0xff]
        %v778 = vld [vmem:[%s293 + $0x3a8] sm:$0xff]
        %v779 = vld [vmem:[%s293 + $0x3b0] sm:$0xff]
        %v780 = vld [vmem:[%s293 + $0x3b8] sm:$0xff]
        %v781 = vld [vmem:[%s293 + $0x3c0] sm:$0xff]
        %v782 = vld [vmem:[%s293 + $0x3c8] sm:$0xff]
        %v783 = vld [vmem:[%s293 + $0x3d0] sm:$0xff]
        %v784 = vld [vmem:[%s293 + $0x3d8] sm:$0xff]
        %v785 = vld [vmem:[%s293 + $0x3e0] sm:$0xff]
        %v786 = vld [vmem:[%s293 + $0x3e8] sm:$0xff]
        %v787 = vld [vmem:[%s293 + $0x3f0] sm:$0xff]
        %v788 = vld [vmem:[%s293 + $0x3f8] sm:$0xff]
        %789 = vmatprep.subr.mxu0 %v692
        %790 = vmatpush1.msra.mxu0 %v691
        %791 = vmatprep.subr.mxu0 %v690
        %792 = vmatpush1.msra.mxu0 %v689
        %793 = vmatprep.subr.mxu0 %v688
        %794 = vmatpush1.msra.mxu0 %v687
        %795 = vmatprep.subr.mxu0 %v686
        %796 = vmatpush1.msra.mxu0 %v685
        %797 = vmatprep.subr.mxu0 %v684
        %798 = vmatpush1.msra.mxu0 %v683
        %799 = vmatprep.subr.mxu0 %v682
        %800 = vmatpush1.msra.mxu0 %v681
        %801 = vmatprep.subr.mxu0 %v680
        %802 = vmatpush1.msra.mxu0 %v679
        %803 = vmatprep.subr.mxu0 %v678
        %804 = vmatpush1.msra.mxu0 %v677
        %805 = vmatprep.subr.mxu0 %v676
        %806 = vmatpush1.msra.mxu0 %v675
        %807 = vmatprep.subr.mxu0 %v674
        %808 = vmatpush1.msra.mxu0 %v673
        %809 = vmatprep.subr.mxu0 %v672
        %810 = vmatpush1.msra.mxu0 %v671
        %811 = vmatprep.subr.mxu0 %v670
        %812 = vmatpush1.msra.mxu0 %v669
        %813 = vmatprep.subr.mxu0 %v668
        %814 = vmatpush1.msra.mxu0 %v667
        %815 = vmatprep.subr.mxu0 %v666
        %816 = vmatpush1.msra.mxu0 %v665
        %817 = vmatprep.subr.mxu0 %v664
        %818 = vmatpush1.msra.mxu0 %v663
        %819 = vmatprep.subr.mxu0 %v662
        %820 = vmatpush1.msra.mxu0 %v661
        %821 = vmatprep.subr.mxu0 %v724
        %822 = vmatpush2.msra.mxu0 %v723
        %823 = vmatprep.subr.mxu0 %v722
        %824 = vmatpush2.msra.mxu0 %v721
        %825 = vmatprep.subr.mxu0 %v720
        %826 = vmatpush2.msra.mxu0 %v719
        %827 = vmatprep.subr.mxu0 %v718
        %828 = vmatpush2.msra.mxu0 %v717
        %829 = vmatprep.subr.mxu0 %v716
        %830 = vmatpush2.msra.mxu0 %v715
        %831 = vmatprep.subr.mxu0 %v714
        %832 = vmatpush2.msra.mxu0 %v713
        %833 = vmatprep.subr.mxu0 %v712
        %834 = vmatpush2.msra.mxu0 %v711
        %835 = vmatprep.subr.mxu0 %v710
        %836 = vmatpush2.msra.mxu0 %v709
        %837 = vmatprep.subr.mxu0 %v708
        %838 = vmatpush2.msra.mxu0 %v707
        %839 = vmatprep.subr.mxu0 %v706
        %840 = vmatpush2.msra.mxu0 %v705
        %841 = vmatprep.subr.mxu0 %v704
        %842 = vmatpush2.msra.mxu0 %v703
        %843 = vmatprep.subr.mxu0 %v702
        %844 = vmatpush2.msra.mxu0 %v701
        %845 = vmatprep.subr.mxu0 %v700
        %846 = vmatpush2.msra.mxu0 %v699
        %847 = vmatprep.subr.mxu0 %v698
        %848 = vmatpush2.msra.mxu0 %v697
        %849 = vmatprep.subr.mxu0 %v696
        %850 = vmatpush2.msra.mxu0 %v695
        %851 = vmatprep.subr.mxu0 %v694
        %852 = vmatpush2.msra.mxu0 %v693
        %853 = vmatprep.mubr.f32.mxu0 %v650
        %854 = vmatmul.mubr.f32.gmra.mxu0 %v649
        %v855 = vpop.f32.mrf.mxu0
        %v856 = vadd.f32 0.0, %v855
        %v857 = vpop.f32.mrf.mxu0
        %v858 = vadd.f32 0.0, %v857
        %859 = vmatprep.mubr.f32.mxu0 %v654
        %860 = vmatmul.mubr.f32.gmra.mxu0 %v653
        %v861 = vpop.f32.mrf.mxu0
        %v862 = vadd.f32 0.0, %v861
        %v863 = vpop.f32.mrf.mxu0
        %v864 = vadd.f32 0.0, %v863
        %865 = vdwg.mxu0
        %866 = vmatprep.subr.mxu0 %v756
        %867 = vmatpush1.msra.mxu0 %v755
        %868 = vmatprep.subr.mxu0 %v754
        %869 = vmatpush1.msra.mxu0 %v753
        %870 = vmatprep.subr.mxu0 %v752
        %871 = vmatpush1.msra.mxu0 %v751
        %872 = vmatprep.subr.mxu0 %v750
        %873 = vmatpush1.msra.mxu0 %v749
        %874 = vmatprep.subr.mxu0 %v748
        %875 = vmatpush1.msra.mxu0 %v747
        %876 = vmatprep.subr.mxu0 %v746
        %877 = vmatpush1.msra.mxu0 %v745
        %878 = vmatprep.subr.mxu0 %v744
        %879 = vmatpush1.msra.mxu0 %v743
        %880 = vmatprep.subr.mxu0 %v742
        %881 = vmatpush1.msra.mxu0 %v741
        %882 = vmatprep.subr.mxu0 %v740
        %883 = vmatpush1.msra.mxu0 %v739
        %884 = vmatprep.subr.mxu0 %v738
        %885 = vmatpush1.msra.mxu0 %v737
        %886 = vmatprep.subr.mxu0 %v736
        %887 = vmatpush1.msra.mxu0 %v735
        %888 = vmatprep.subr.mxu0 %v734
        %889 = vmatpush1.msra.mxu0 %v733
        %890 = vmatprep.subr.mxu0 %v732
        %891 = vmatpush1.msra.mxu0 %v731
        %892 = vmatprep.subr.mxu0 %v730
        %893 = vmatpush1.msra.mxu0 %v729
        %894 = vmatprep.subr.mxu0 %v728
        %895 = vmatpush1.msra.mxu0 %v727
        %896 = vmatprep.subr.mxu0 %v726
        %897 = vmatpush1.msra.mxu0 %v725
        %898 = vmatprep.subr.mxu0 %v788
        %899 = vmatpush2.msra.mxu0 %v787
        %900 = vmatprep.subr.mxu0 %v786
        %901 = vmatpush2.msra.mxu0 %v785
        %902 = vmatprep.subr.mxu0 %v784
        %903 = vmatpush2.msra.mxu0 %v783
        %904 = vmatprep.subr.mxu0 %v782
        %905 = vmatpush2.msra.mxu0 %v781
        %906 = vmatprep.subr.mxu0 %v780
        %907 = vmatpush2.msra.mxu0 %v779
        %908 = vmatprep.subr.mxu0 %v778
        %909 = vmatpush2.msra.mxu0 %v777
        %910 = vmatprep.subr.mxu0 %v776
        %911 = vmatpush2.msra.mxu0 %v775
        %912 = vmatprep.subr.mxu0 %v774
        %913 = vmatpush2.msra.mxu0 %v773
        %914 = vmatprep.subr.mxu0 %v772
        %915 = vmatpush2.msra.mxu0 %v771
        %916 = vmatprep.subr.mxu0 %v770
        %917 = vmatpush2.msra.mxu0 %v769
        %918 = vmatprep.subr.mxu0 %v768
        %919 = vmatpush2.msra.mxu0 %v767
        %920 = vmatprep.subr.mxu0 %v766
        %921 = vmatpush2.msra.mxu0 %v765
        %922 = vmatprep.subr.mxu0 %v764
        %923 = vmatpush2.msra.mxu0 %v763
        %924 = vmatprep.subr.mxu0 %v762
        %925 = vmatpush2.msra.mxu0 %v761
        %926 = vmatprep.subr.mxu0 %v760
        %927 = vmatpush2.msra.mxu0 %v759
        %928 = vmatprep.subr.mxu0 %v758
        %929 = vmatpush2.msra.mxu0 %v757
        %930 = vmatprep.mubr.f32.mxu0 %v652
        %931 = vmatmul.mubr.f32.gmra.mxu0 %v651
        %v932 = vpop.f32.mrf.mxu0
        %v933 = vadd.f32 %v856, %v932
        %v934 = vpop.f32.mrf.mxu0
        %v935 = vadd.f32 %v858, %v934
        %936 = vmatprep.mubr.f32.mxu0 %v656
        %937 = vmatmul.mubr.f32.gmra.mxu0 %v655
        %v938 = vpop.f32.mrf.mxu0
        %v939 = vadd.f32 %v862, %v938
        %v940 = vpop.f32.mrf.mxu0
        %v941 = vadd.f32 %v864, %v940
        %942 = vdwg.mxu0
        %v943 = vadd.f32 %v657, %v933
        %v944 = vadd.f32 %v658, %v935
        %v945 = vadd.f32 %v659, %v939
        %v946 = vadd.f32 %v660, %v941
        %947 = vst [vmem:[#allocation2] sm:$0xff] %v943
        %948 = vst [vmem:[#allocation2 + $0x8] sm:$0xff] %v944
        %949 = vst [vmem:[#allocation2 + $0x10] sm:$0xff] %v945
        %950 = vst [vmem:[#allocation2 + $0x18] sm:$0xff] %v946
        %p951 = scmp.eq.s32.totalorder %s26, 1
        // Predicated region
        $region57: #{feed_forward_network.1} parent=39 // pred_check
          %p952 = pneg %p951
        $region58: #{feed_forward_network.1} parent=39 // pred_check_branch
          %954 = sbr.rel (%p952) target = $region60
        $region59: #{feed_forward_network.1} parent=39 // pred_region
          %v955 = vld [vmem:[#allocation2] sm:$0xff]
          %v956 = vld [vmem:[#allocation2 + $0x8] sm:$0xff]
          %v957 = vld [vmem:[#allocation2 + $0x10] sm:$0xff]
          %v958 = vld [vmem:[#allocation2 + $0x18] sm:$0xff]
          %v959 = vld [vmem:[%s4] sm:$0x3]
          %v961 = vlaneseq
          %v962 = vshrl.u32 %v961, 7
          %v963 = vsub.s32 0, %v962
          %v964 = vrot.slane %v959, %v963
          %v965 = vlaneseq
          %v966 = vshrl.u32 %v965, 7
          %v967 = vsub.s32 1, %v966
          %v968 = vrot.slane %v959, %v967
          %v971 = vadd.f32 %v955, %v964
          %v972 = vadd.f32 %v956, %v968
          %v973 = vadd.f32 %v957, %v964
          %v974 = vadd.f32 %v958, %v968
          %975 = vst [vmem:[#allocation9] sm:$0xff] %v971
          %976 = vst [vmem:[#allocation9 + $0x8] sm:$0xff] %v972
          %977 = vst [vmem:[#allocation9 + $0x10] sm:$0xff] %v973
          %978 = vst [vmem:[#allocation9 + $0x18] sm:$0xff] %v974
        $region60: #{feed_forward_network.1} parent=39 // pred_fallthru
          _
        // Predicated region
        $region61: #{feed_forward_network.1} parent=39 // pred_check
          %p979 = pneg %p176
        $region62: #{feed_forward_network.1} parent=39 // pred_check_branch
          %981 = sbr.rel (%p979) target = $region64
        $region63: #{feed_forward_network.1} parent=39 // pred_region
          %s982 = smul.u32 2, %s25
          %s984 = ssub.s32 512, 512
          %985 = vsyncadd [#allocation5], %s984
          %s986 = smul.addr %s982, 2
          %s987 = smul.addr %s986, 128
          %s988 = scalar_lea.hbm %s5, %s987
          %s989 = sshll.u32 [#allocation9], 4
          %s990 = int_to_ptr.vmem [resolvable:$true] %s989
          %995 = dma.vmem_to_hbm [thread:$0]  %s990, 512, %s988, [#allocation5], 256, 256, 16
        $region64: #{feed_forward_network.1} parent=39 // pred_fallthru
          _
        // Predicated region
        $region65: #{feed_forward_network.1} parent=39 // pred_check
          %p996 = pneg %p176
        $region66: #{feed_forward_network.1} parent=39 // pred_check_branch
          %998 = sbr.rel (%p996) target = $region68
        $region67: #{feed_forward_network.1} parent=39 // pred_region
          %999 = dma.done [#allocation5], 512
        $region68: #{feed_forward_network.1} parent=39 // pred_fallthru
          _
      $region40: #{feed_forward_network.1} parent=5 // pred_fallthru
        _
      %p1000 = scmp.le.s32.totalorder 2, %s16
      // Predicated region
      $region69: #{feed_forward_network.1} parent=5 // pred_check
        %p1001 = pneg %p1000
      $region70: #{feed_forward_network.1} parent=5 // pred_check_branch
        %1003 = sbr.rel (%p1001) target = $region72
      $region71: #{feed_forward_network.1} parent=5 // pred_region
        %s1004 = ssub.s32 %s16, 2
      $region72: #{feed_forward_network.1} parent=5 // pred_fallthru
        _
    $region6: #{feed_forward_network.1} parent=1 // loop_footer
      %s20 = sadd.s32 1, %s16
    $region7: #{feed_forward_network.1} parent=1 // loop_footer_branch
      %15 = sbr.rel target = $region3
    $region8: #{feed_forward_network.1} parent=1 // loop_exit
      _
    %1005 = vsyncpa [#allocation4], 1
    %s1006 = scalar_lea.sflag [#allocation4], 1
    %1007 = vsyncpa %s1006, 1
    %1008 = vsyncpa [#allocation7], 1
    %s1009 = scalar_lea.sflag [#allocation7], 1
    %1010 = vsyncpa %s1009, 1
    %1011 = vsyncpa [#allocation5], 1
    %s1012 = scalar_lea.sflag [#allocation5], 1
    %1013 = vsyncpa %s1012, 1

</llo_original>
